<compile_context>
chip_gen: v7x
topology: tpu7x:2x2x1
jax: 0.10.0
libtpu: 0.0.40
codegen_flags: <defaults>
</compile_context>

<pallas_src>
import functools

import jax
import jax.numpy as jnp
from jax.experimental import pallas as pl
from jax.experimental.pallas import tpu as pltpu


# Packed parameter slab layout (flat f32[25] in SMEM):
#   [0:8)   w1 (2,4) row-major  -> w1[k,o] at  0 + 4*k + o
#   [8:12)  b1 (4,)
#   [12:20) w2 (4,2) row-major  -> w2[k,o] at 12 + 2*k + o
#   [20:22) b2 (2,)
#   [22:24) w3 (2,1)            -> w3[k,0] at 22 + k
#   [24]    b3
_W1, _B1, _W2, _B2, _W3, _B3 = 0, 8, 12, 20, 22, 24
_N_PARAMS = 25

_SUB, _LANE = 8, 128
_TILE_UNIT = _SUB * _LANE          # 1024 batch elements = one full f32 vreg


def _round_up(a, b):
    return (a + b - 1) // b * b


def _mlp_kernel(p_ref, x_ref, o_ref):
    # p_ref : SMEM f32[25]      packed parameters (scalar reads, broadcast)
    # x_ref : VMEM (2, 8, cols) batch-on-(sublane, lane) input tile
    # o_ref : VMEM (8, cols)    batch-on-(sublane, lane) output tile
    x0 = x_ref[0]                              # (8, cols) full-vreg slabs
    x1 = x_ref[1]

    # Layer 1: Linear(2,4) + ReLU -- unrolled broadcast MACs (VPU only).
    h1 = []
    for o in range(4):
        z = x0 * p_ref[_W1 + o] + x1 * p_ref[_W1 + 4 + o] + p_ref[_B1 + o]
        h1.append(jnp.maximum(z, 0.0))

    # Layer 2: Linear(4,2) + ReLU
    h2 = []
    for o in range(2):
        z = (h1[0] * p_ref[_W2 + 0 + o]
             + h1[1] * p_ref[_W2 + 2 + o]
             + h1[2] * p_ref[_W2 + 4 + o]
             + h1[3] * p_ref[_W2 + 6 + o]
             + p_ref[_B2 + o])
        h2.append(jnp.maximum(z, 0.0))

    # Layer 3: Linear(2,1) + Sigmoid via the exact tanh identity
    # sigmoid(z) = 0.5 * tanh(z/2) + 0.5  (single EUP push, no approx recip).
    z = h2[0] * p_ref[_W3] + h2[1] * p_ref[_W3 + 1] + p_ref[_B3]
    o_ref[...] = 0.5 * jnp.tanh(0.5 * z) + 0.5


def pack_params(w1, b1, w2, b2, w3, b3):
    return jnp.concatenate([
        w1.reshape(-1), b1.reshape(-1),
        w2.reshape(-1), b2.reshape(-1),
        w3.reshape(-1), b3.reshape(-1),
    ]).astype(jnp.float32)


@functools.partial(jax.jit, static_argnames=("tb",))
def _forward(x, w1, b1, w2, b2, w3, b3, *, tb):
    B = x.shape[0]
    b_pad = _round_up(B, tb)
    cols = tb // _SUB                 # lanes per tile row (multiple of 128)
    rows = b_pad // cols              # total sublane-rows (= 8 * num tiles)
    ntiles = b_pad // tb

    params = pack_params(w1, b1, w2, b2, w3, b3)

    # Batch-on-(sublane, lane) layout: element (f, r, c) is batch r*cols + c.
    # Transpose/pad/reshape are fused by XLA under this jit around the kernel.
    # TODO(synk): a manual strided DMA from an ANY-space (B,2) ref could avoid
    # the extra HBM pass of this repack entirely.
    xT = jnp.pad(x.T.astype(jnp.float32), ((0, 0), (0, b_pad - B)))
    xT = xT.reshape(2, rows, cols)

    y = pl.pallas_call(
        _mlp_kernel,
        out_shape=jax.ShapeDtypeStruct((rows, cols), jnp.float32),
        grid_spec=pltpu.PrefetchScalarGridSpec(
            num_scalar_prefetch=0,
            grid=(ntiles,),
            in_specs=[
                # Whole packed parameter slab, resident in SMEM (one DMA).
                pl.BlockSpec(memory_space=pltpu.MemorySpace.SMEM),
                # Lane+sublane-dense input tile over the batch axis.
                pl.BlockSpec((2, _SUB, cols), lambda i: (0, i, 0)),
            ],
            out_specs=pl.BlockSpec((_SUB, cols), lambda i: (i, 0)),
        ),
        compiler_params=pltpu.CompilerParams(
            dimension_semantics=("parallel",)),   # v7x: shard steps over 2 TCs
        cost_estimate=pl.CostEstimate(
            flops=44 * b_pad,
            transcendentals=b_pad,
            bytes_accessed=12 * b_pad),           # 8 B in + 4 B out per element
    )(params, xT)

    # Padded batch columns produce garbage sigmoid values; sliced off here.
    return y.reshape(b_pad)[:B].reshape(B, 1)


def titanic_mlp(x, w1, b1, w2, b2, w3, b3, *, max_tile=262144):
    """x: (B, 2) f32. Weights are (in, out); biases are (out,). Returns (B, 1)."""
    B = x.shape[0]
    # Tile sizing: full 1024-element vregs, aim for >= 4 grid steps when the
    # batch allows it (feeds both v7x TensorCores), cap at max_tile elements
    # (~2 MiB in + 1 MiB out per tile; double-buffered ~6 MiB, safe for v5e's
    # 16 MiB scoped VMEM and v7x's 64 MiB physical VMEM).
    tb = _round_up(max(-(-B // 4), 1), _TILE_UNIT)
    tb = min(tb, max_tile)
    return _forward(x, w1, b1, w2, b2, w3, b3, tb=tb)


def init_params(key):
    """Deterministic init mimicking PyTorch nn.Linear default U(-1/sqrt(fan_in), +)."""
    def linear(k, fan_in, fan_out):
        kw, kb = jax.random.split(k)
        bound = 1.0 / jnp.sqrt(fan_in)
        w = jax.random.uniform(kw, (fan_in, fan_out), jnp.float32, -bound, bound)
        b = jax.random.uniform(kb, (fan_out,), jnp.float32, -bound, bound)
        return w, b

    k1, k2, k3 = jax.random.split(key, 3)
    w1, b1 = linear(k1, 2, 4)
    w2, b2 = linear(k2, 4, 2)
    w3, b3 = linear(k3, 2, 1)
    return w1, b1, w2, b2, w3, b3


def reference_forward(x, w1, b1, w2, b2, w3, b3):
    h1 = jnp.maximum(x @ w1 + b1, 0.0)
    h2 = jnp.maximum(h1 @ w2 + b2, 0.0)
    return jax.nn.sigmoid(h2 @ w3 + b3)


if __name__ == "__main__":
    key = jax.random.PRNGKey(0)
    kx, kx2, kp = jax.random.split(key, 3)
    params = init_params(kp)

    # Small benchmark batch (matches the tiny 2-feature classifier).
    B = 8
    x = jax.random.normal(kx, (B, 2), jnp.float32)
    y = titanic_mlp(x, *params)
    jax.block_until_ready(y)
    y_ref = reference_forward(x, *params)
    assert y.shape == (B, 1)
    assert jnp.allclose(y, y_ref, atol=1e-5, rtol=1e-5), (y, y_ref)

    # Second check: non-multiple-of-tile batch exercising multiple grid steps
    # and the sublane/lane repack + padding slice.
    B2 = 5000
    x2 = jax.random.normal(kx2, (B2, 2), jnp.float32)
    y2 = titanic_mlp(x2, *params)
    jax.block_until_ready(y2)
    y2_ref = reference_forward(x2, *params)
    assert y2.shape == (B2, 1)
    assert jnp.allclose(y2, y2_ref, atol=1e-5, rtol=1e-5)

    print("KERNEL_OK")
</pallas_src>

<mosaic_0001>
module attributes {stable_mosaic.version = 11 : i64} {
  func.func @_mlp_kernel(%arg0: i32, %arg1: memref<25xf32, #tpu.memory_space<smem>>, %arg2: memref<2x8x128xf32, #tpu.memory_space<vmem>>, %arg3: memref<8x128xf32, #tpu.memory_space<vmem>>) attributes {dimension_semantics = [#tpu.dimension_semantics<parallel>], iteration_bounds = array<i64: 1>, scalar_prefetch = 0 : i64, scratch_operands = 0 : i64, tpu.core_type = #tpu.core_type<tc>, window_params = [{transform_indices = @transform_0, window_bounds = array<i64: 25>}, {transform_indices = @transform_1, window_bounds = array<i64: 2, 8, 128>}, {transform_indices = @transform_2, window_bounds = array<i64: 8, 128>}]} {
    %c0 = arith.constant 0 : index
    %c0_0 = arith.constant 0 : index
    %c0_1 = arith.constant 0 : index
    %0 = vector.load %arg2[%c0, %c0_0, %c0_1] : memref<2x8x128xf32, #tpu.memory_space<vmem>>, vector<1x8x128xf32>
    %1 = vector.shape_cast %0 : vector<1x8x128xf32> to vector<8x128xf32>
    %c1 = arith.constant 1 : index
    %c0_2 = arith.constant 0 : index
    %c0_3 = arith.constant 0 : index
    %2 = vector.load %arg2[%c1, %c0_2, %c0_3] : memref<2x8x128xf32, #tpu.memory_space<vmem>>, vector<1x8x128xf32>
    %3 = vector.shape_cast %2 : vector<1x8x128xf32> to vector<8x128xf32>
    %c0_4 = arith.constant 0 : index
    %4 = memref.load %arg1[%c0_4] : memref<25xf32, #tpu.memory_space<smem>>
    %5 = vector.broadcast %4 : f32 to vector<8x128xf32>
    %6 = arith.mulf %1, %5 : vector<8x128xf32>
    %c4 = arith.constant 4 : index
    %7 = memref.load %arg1[%c4] : memref<25xf32, #tpu.memory_space<smem>>
    %8 = vector.broadcast %7 : f32 to vector<8x128xf32>
    %9 = arith.mulf %3, %8 : vector<8x128xf32>
    %10 = arith.addf %6, %9 : vector<8x128xf32>
    %c8 = arith.constant 8 : index
    %11 = memref.load %arg1[%c8] : memref<25xf32, #tpu.memory_space<smem>>
    %12 = vector.broadcast %11 : f32 to vector<8x128xf32>
    %13 = arith.addf %10, %12 : vector<8x128xf32>
    %cst = arith.constant 0.000000e+00 : f32
    %14 = vector.broadcast %cst : f32 to vector<8x128xf32>
    %15 = arith.maximumf %13, %14 : vector<8x128xf32>
    %c1_5 = arith.constant 1 : index
    %16 = memref.load %arg1[%c1_5] : memref<25xf32, #tpu.memory_space<smem>>
    %17 = vector.broadcast %16 : f32 to vector<8x128xf32>
    %18 = arith.mulf %1, %17 : vector<8x128xf32>
    %c5 = arith.constant 5 : index
    %19 = memref.load %arg1[%c5] : memref<25xf32, #tpu.memory_space<smem>>
    %20 = vector.broadcast %19 : f32 to vector<8x128xf32>
    %21 = arith.mulf %3, %20 : vector<8x128xf32>
    %22 = arith.addf %18, %21 : vector<8x128xf32>
    %c9 = arith.constant 9 : index
    %23 = memref.load %arg1[%c9] : memref<25xf32, #tpu.memory_space<smem>>
    %24 = vector.broadcast %23 : f32 to vector<8x128xf32>
    %25 = arith.addf %22, %24 : vector<8x128xf32>
    %cst_6 = arith.constant 0.000000e+00 : f32
    %26 = vector.broadcast %cst_6 : f32 to vector<8x128xf32>
    %27 = arith.maximumf %25, %26 : vector<8x128xf32>
    %c2 = arith.constant 2 : index
    %28 = memref.load %arg1[%c2] : memref<25xf32, #tpu.memory_space<smem>>
    %29 = vector.broadcast %28 : f32 to vector<8x128xf32>
    %30 = arith.mulf %1, %29 : vector<8x128xf32>
    %c6 = arith.constant 6 : index
    %31 = memref.load %arg1[%c6] : memref<25xf32, #tpu.memory_space<smem>>
    %32 = vector.broadcast %31 : f32 to vector<8x128xf32>
    %33 = arith.mulf %3, %32 : vector<8x128xf32>
    %34 = arith.addf %30, %33 : vector<8x128xf32>
    %c10 = arith.constant 10 : index
    %35 = memref.load %arg1[%c10] : memref<25xf32, #tpu.memory_space<smem>>
    %36 = vector.broadcast %35 : f32 to vector<8x128xf32>
    %37 = arith.addf %34, %36 : vector<8x128xf32>
    %cst_7 = arith.constant 0.000000e+00 : f32
    %38 = vector.broadcast %cst_7 : f32 to vector<8x128xf32>
    %39 = arith.maximumf %37, %38 : vector<8x128xf32>
    %c3 = arith.constant 3 : index
    %40 = memref.load %arg1[%c3] : memref<25xf32, #tpu.memory_space<smem>>
    %41 = vector.broadcast %40 : f32 to vector<8x128xf32>
    %42 = arith.mulf %1, %41 : vector<8x128xf32>
    %c7 = arith.constant 7 : index
    %43 = memref.load %arg1[%c7] : memref<25xf32, #tpu.memory_space<smem>>
    %44 = vector.broadcast %43 : f32 to vector<8x128xf32>
    %45 = arith.mulf %3, %44 : vector<8x128xf32>
    %46 = arith.addf %42, %45 : vector<8x128xf32>
    %c11 = arith.constant 11 : index
    %47 = memref.load %arg1[%c11] : memref<25xf32, #tpu.memory_space<smem>>
    %48 = vector.broadcast %47 : f32 to vector<8x128xf32>
    %49 = arith.addf %46, %48 : vector<8x128xf32>
    %cst_8 = arith.constant 0.000000e+00 : f32
    %50 = vector.broadcast %cst_8 : f32 to vector<8x128xf32>
    %51 = arith.maximumf %49, %50 : vector<8x128xf32>
    %c12 = arith.constant 12 : index
    %52 = memref.load %arg1[%c12] : memref<25xf32, #tpu.memory_space<smem>>
    %53 = vector.broadcast %52 : f32 to vector<8x128xf32>
    %54 = arith.mulf %15, %53 : vector<8x128xf32>
    %c14 = arith.constant 14 : index
    %55 = memref.load %arg1[%c14] : memref<25xf32, #tpu.memory_space<smem>>
    %56 = vector.broadcast %55 : f32 to vector<8x128xf32>
    %57 = arith.mulf %27, %56 : vector<8x128xf32>
    %58 = arith.addf %54, %57 : vector<8x128xf32>
    %c16 = arith.constant 16 : index
    %59 = memref.load %arg1[%c16] : memref<25xf32, #tpu.memory_space<smem>>
    %60 = vector.broadcast %59 : f32 to vector<8x128xf32>
    %61 = arith.mulf %39, %60 : vector<8x128xf32>
    %62 = arith.addf %58, %61 : vector<8x128xf32>
    %c18 = arith.constant 18 : index
    %63 = memref.load %arg1[%c18] : memref<25xf32, #tpu.memory_space<smem>>
    %64 = vector.broadcast %63 : f32 to vector<8x128xf32>
    %65 = arith.mulf %51, %64 : vector<8x128xf32>
    %66 = arith.addf %62, %65 : vector<8x128xf32>
    %c20 = arith.constant 20 : index
    %67 = memref.load %arg1[%c20] : memref<25xf32, #tpu.memory_space<smem>>
    %68 = vector.broadcast %67 : f32 to vector<8x128xf32>
    %69 = arith.addf %66, %68 : vector<8x128xf32>
    %cst_9 = arith.constant 0.000000e+00 : f32
    %70 = vector.broadcast %cst_9 : f32 to vector<8x128xf32>
    %71 = arith.maximumf %69, %70 : vector<8x128xf32>
    %c13 = arith.constant 13 : index
    %72 = memref.load %arg1[%c13] : memref<25xf32, #tpu.memory_space<smem>>
    %73 = vector.broadcast %72 : f32 to vector<8x128xf32>
    %74 = arith.mulf %15, %73 : vector<8x128xf32>
    %c15 = arith.constant 15 : index
    %75 = memref.load %arg1[%c15] : memref<25xf32, #tpu.memory_space<smem>>
    %76 = vector.broadcast %75 : f32 to vector<8x128xf32>
    %77 = arith.mulf %27, %76 : vector<8x128xf32>
    %78 = arith.addf %74, %77 : vector<8x128xf32>
    %c17 = arith.constant 17 : index
    %79 = memref.load %arg1[%c17] : memref<25xf32, #tpu.memory_space<smem>>
    %80 = vector.broadcast %79 : f32 to vector<8x128xf32>
    %81 = arith.mulf %39, %80 : vector<8x128xf32>
    %82 = arith.addf %78, %81 : vector<8x128xf32>
    %c19 = arith.constant 19 : index
    %83 = memref.load %arg1[%c19] : memref<25xf32, #tpu.memory_space<smem>>
    %84 = vector.broadcast %83 : f32 to vector<8x128xf32>
    %85 = arith.mulf %51, %84 : vector<8x128xf32>
    %86 = arith.addf %82, %85 : vector<8x128xf32>
    %c21 = arith.constant 21 : index
    %87 = memref.load %arg1[%c21] : memref<25xf32, #tpu.memory_space<smem>>
    %88 = vector.broadcast %87 : f32 to vector<8x128xf32>
    %89 = arith.addf %86, %88 : vector<8x128xf32>
    %cst_10 = arith.constant 0.000000e+00 : f32
    %90 = vector.broadcast %cst_10 : f32 to vector<8x128xf32>
    %91 = arith.maximumf %89, %90 : vector<8x128xf32>
    %c22 = arith.constant 22 : index
    %92 = memref.load %arg1[%c22] : memref<25xf32, #tpu.memory_space<smem>>
    %93 = vector.broadcast %92 : f32 to vector<8x128xf32>
    %94 = arith.mulf %71, %93 : vector<8x128xf32>
    %c23 = arith.constant 23 : index
    %95 = memref.load %arg1[%c23] : memref<25xf32, #tpu.memory_space<smem>>
    %96 = vector.broadcast %95 : f32 to vector<8x128xf32>
    %97 = arith.mulf %91, %96 : vector<8x128xf32>
    %98 = arith.addf %94, %97 : vector<8x128xf32>
    %c24 = arith.constant 24 : index
    %99 = memref.load %arg1[%c24] : memref<25xf32, #tpu.memory_space<smem>>
    %100 = vector.broadcast %99 : f32 to vector<8x128xf32>
    %101 = arith.addf %98, %100 : vector<8x128xf32>
    %cst_11 = arith.constant 5.000000e-01 : f32
    %102 = vector.broadcast %cst_11 : f32 to vector<8x128xf32>
    %103 = arith.mulf %102, %101 : vector<8x128xf32>
    %104 = math.tanh %103 : vector<8x128xf32>
    %cst_12 = arith.constant 5.000000e-01 : f32
    %105 = vector.broadcast %cst_12 : f32 to vector<8x128xf32>
    %106 = arith.mulf %105, %104 : vector<8x128xf32>
    %cst_13 = arith.constant 5.000000e-01 : f32
    %107 = vector.broadcast %cst_13 : f32 to vector<8x128xf32>
    %108 = arith.addf %106, %107 : vector<8x128xf32>
    %c0_14 = arith.constant 0 : index
    %c0_15 = arith.constant 0 : index
    %109 = vector.load %arg3[%c0_14, %c0_15] : memref<8x128xf32, #tpu.memory_space<vmem>>, vector<8x128xf32>
    tpu.vector_store %arg3[%c0_14, %c0_15], %108 {strides = array<i32>} : memref<8x128xf32, #tpu.memory_space<vmem>>, vector<8x128xf32>,
    return
  }
  func.func @transform_0(%arg0: i32) -> i32 {
    %c0_i32 = arith.constant 0 : i32
    %c0_i32_0 = arith.constant 0 : i32
    return %c0_i32 : i32
  }
  func.func @transform_1(%arg0: i32) -> (i32, i32, i32) {
    %c0_i32 = arith.constant 0 : i32
    %c0_i32_0 = arith.constant 0 : i32
    %c0_i32_1 = arith.constant 0 : i32
    return %c0_i32, %arg0, %c0_i32_0 : i32, i32, i32
  }
  func.func @transform_2(%arg0: i32) -> (i32, i32) {
    %c0_i32 = arith.constant 0 : i32
    %c0_i32_0 = arith.constant 0 : i32
    return %arg0, %c0_i32 : i32, i32
  }
}

</mosaic_0001>

<llo_original>
// kernel: _forward.1
$region0: #{_forward.1}
  #allocation0 [shape = 'u32[]', space=smem, size = 0x4, offset = 0x4, fixed_abs, tag = 'smem constant byte address 0x4 - core index']
  #allocation1 [shape = 'u32[144,128]{1,0:T(1,128)}', space=vmem, size = 0x12000, scoped, tag = 'internal scratch']
  %s0 = inlined_call_operand.vmem [shape: f32[25], index: 0, kind: input, shape index: {}]
  %s1 = inlined_call_operand.vmem [shape: f32[2,8,128], index: 1, kind: input, shape index: {}]
  %s2 = inlined_call_operand.vmem [shape: f32[8,128], index: 2, kind: output, shape index: {}]
  %s3 = sld [smem:[#allocation0]]
  $region22: #{_forward.1} parent=0
    _
  %s5 = ssub.s32 1, %s3
  %s6 = scalar_select 0, %s5, %s3
  $region1: #{_forward.1} parent=0
    #allocation2 [shape = 'u8[512]{0}', space=smem, size = 0x200, scoped, tag = 'input window, operand 0, single buffered']
    #allocation3 [shape = 's32[1]{0}', space=sflag, size = 0x4, scoped, tag = 'scoped memory for _forward.1']
    %7 = vsyncpa [#allocation3], 0
    // Predicated region
    $region2: #{_forward.1} parent=1 // pred_check
      _
    $region3: #{_forward.1} parent=1 // pred_check_branch
      %9 = sbr.rel (0) target = $region5
    $region4: #{_forward.1} parent=1 // pred_region
      %s11 = ssub.s32 16, 16
      %12 = vsyncadd [#allocation3], %s11
      %s14 = sshll.u32 %s0, 4
      %s15 = int_to_ptr.vmem [resolvable:$true] %s14
      %17 = dma.vmem_to_smem %s15, 16, [#allocation2], [#allocation3]
    $region5: #{_forward.1} parent=1 // pred_fallthru
      _
    // Predicated region
    $region6: #{_forward.1} parent=1 // pred_check
      _
    $region7: #{_forward.1} parent=1 // pred_check_branch
      %19 = sbr.rel (0) target = $region9
    $region8: #{_forward.1} parent=1 // pred_region
      _
    $region9: #{_forward.1} parent=1 // pred_fallthru
      _
    // Predicated region
    $region10: #{_forward.1} parent=1 // pred_check
      _
    $region11: #{_forward.1} parent=1 // pred_check_branch
      %21 = sbr.rel (0) target = $region13
    $region12: #{_forward.1} parent=1 // pred_region
      %22 = dma.done [#allocation3], 16
    $region13: #{_forward.1} parent=1 // pred_fallthru
      _
    %23 = sfence
    %v24 = vld [vmem:[%s1] sm:$0xff]
    %s25 = scalar_lea.vmem %s1, 8
    %v26 = vld [vmem:[%s25] sm:$0xff]
    %s27 = sld [smem:[#allocation2]]
    %v28 = vstv %s27
    %v29 = vmul.f32 %v24, %v28
    %s30 = sld [smem:[#allocation2 + $0x4]]
    %v31 = vstv %s30
    %v32 = vmul.f32 %v26, %v31
    %v33 = vadd.f32 %v29, %v32
    %s34 = sld [smem:[#allocation2 + $0x8]]
    %v35 = vstv %s34
    %v36 = vadd.f32 %v33, %v35
    %v37 = vmax.f32 %v36, 0.0
    %s38 = sld [smem:[#allocation2 + $0x1]]
    %v39 = vstv %s38
    %v40 = vmul.f32 %v24, %v39
    %s41 = sld [smem:[#allocation2 + $0x5]]
    %v42 = vstv %s41
    %v43 = vmul.f32 %v26, %v42
    %v44 = vadd.f32 %v40, %v43
    %s45 = sld [smem:[#allocation2 + $0x9]]
    %v46 = vstv %s45
    %v47 = vadd.f32 %v44, %v46
    %v48 = vmax.f32 %v47, 0.0
    %s49 = sld [smem:[#allocation2 + $0x2]]
    %v50 = vstv %s49
    %v51 = vmul.f32 %v24, %v50
    %s52 = sld [smem:[#allocation2 + $0x6]]
    %v53 = vstv %s52
    %v54 = vmul.f32 %v26, %v53
    %v55 = vadd.f32 %v51, %v54
    %s56 = sld [smem:[#allocation2 + $0xa]]
    %v57 = vstv %s56
    %v58 = vadd.f32 %v55, %v57
    %v59 = vmax.f32 %v58, 0.0
    %s60 = sld [smem:[#allocation2 + $0x3]]
    %v61 = vstv %s60
    %v62 = vmul.f32 %v24, %v61
    %s63 = sld [smem:[#allocation2 + $0x7]]
    %v64 = vstv %s63
    %v65 = vmul.f32 %v26, %v64
    %v66 = vadd.f32 %v62, %v65
    %s67 = sld [smem:[#allocation2 + $0xb]]
    %v68 = vstv %s67
    %v69 = vadd.f32 %v66, %v68
    %v70 = vmax.f32 %v69, 0.0
    %s71 = sld [smem:[#allocation2 + $0xc]]
    %v72 = vstv %s71
    %v73 = vmul.f32 %v37, %v72
    %s74 = sld [smem:[#allocation2 + $0xe]]
    %v75 = vstv %s74
    %v76 = vmul.f32 %v48, %v75
    %v77 = vadd.f32 %v73, %v76
    %s78 = sld [smem:[#allocation2 + $0x10]]
    %v79 = vstv %s78
    %v80 = vmul.f32 %v59, %v79
    %v81 = vadd.f32 %v77, %v80
    %s82 = sld [smem:[#allocation2 + $0x12]]
    %v83 = vstv %s82
    %v84 = vmul.f32 %v70, %v83
    %v85 = vadd.f32 %v81, %v84
    %s86 = sld [smem:[#allocation2 + $0x14]]
    %v87 = vstv %s86
    %v88 = vadd.f32 %v85, %v87
    %v89 = vmax.f32 %v88, 0.0
    %s90 = sld [smem:[#allocation2 + $0xd]]
    %v91 = vstv %s90
    %v92 = vmul.f32 %v37, %v91
    %s93 = sld [smem:[#allocation2 + $0xf]]
    %v94 = vstv %s93
    %v95 = vmul.f32 %v48, %v94
    %v96 = vadd.f32 %v92, %v95
    %s97 = sld [smem:[#allocation2 + $0x11]]
    %v98 = vstv %s97
    %v99 = vmul.f32 %v59, %v98
    %v100 = vadd.f32 %v96, %v99
    %s101 = sld [smem:[#allocation2 + $0x13]]
    %v102 = vstv %s101
    %v103 = vmul.f32 %v70, %v102
    %v104 = vadd.f32 %v100, %v103
    %s105 = sld [smem:[#allocation2 + $0x15]]
    %v106 = vstv %s105
    %v107 = vadd.f32 %v104, %v106
    %v108 = vmax.f32 %v107, 0.0
    %s109 = sld [smem:[#allocation2 + $0x16]]
    %v110 = vstv %s109
    %v111 = vmul.f32 %v89, %v110
    %s112 = sld [smem:[#allocation2 + $0x17]]
    %v113 = vstv %s112
    %v114 = vmul.f32 %v108, %v113
    %v115 = vadd.f32 %v111, %v114
    %s116 = sld [smem:[#allocation2 + $0x18]]
    %v117 = vstv %s116
    %v118 = vadd.f32 %v115, %v117
    %v119 = vmul.f32 %v118, 0.5
    %v120 = vtanh.pop %v119
    %v121 = vmul.f32 %v120, 0.5
    %v122 = vadd.f32 %v121, 0.5
    %123 = vst [vmem:[%s2] sm:$0xff] %v122
    // Predicated region
    $region14: #{_forward.1} parent=1 // pred_check
      _
    $region15: #{_forward.1} parent=1 // pred_check_branch
      %125 = sbr.rel (0) target = $region17
    $region16: #{_forward.1} parent=1 // pred_region
      _
    $region17: #{_forward.1} parent=1 // pred_fallthru
      _
    // Predicated region
    $region18: #{_forward.1} parent=1 // pred_check
      _
    $region19: #{_forward.1} parent=1 // pred_check_branch
      %127 = sbr.rel (0) target = $region21
    $region20: #{_forward.1} parent=1 // pred_region
      _
    $region21: #{_forward.1} parent=1 // pred_fallthru
      _
    %128 = vsyncpa [#allocation3], 1

</llo_original>
